<compile_context>
chip_gen: v7x
topology: tpu7x:2x2x1
jax: 0.10.0
libtpu: 0.0.40
codegen_flags: <defaults>
</compile_context>

<pallas_src>
import functools

import jax
import jax.numpy as jnp
from jax.experimental import pallas as pl
from jax.experimental.pallas import tpu as pltpu

_NEG = -1e9  # spatial padding value: exp underflows to exactly 0, stays finite


# ---------------------------------------------------------------------------
# Fused kernel: one grid step per TB batch elements.
#   inputs : A CAM blocks (TB, K, HWp), top-3 mask (TB, K, 1),
#            true-class one-hot (TB, K, 1).
#   output : one (1, 8, 128) tile -- neg partial sum in row 0, pos in row 1.
# ---------------------------------------------------------------------------
def _acvc_kernel(*refs, A, inv_T, inv_HW, HW, eps):
    cam_refs = refs[:A]                  # A x (TB, K, HWp)
    neg_mask_ref = refs[A]               # (TB, K, 1)
    onehot_ref = refs[A + 1]             # (TB, K, 1)
    out_ref = refs[A + 2]                # (1, 8, 128)

    TB, K, HWp = cam_refs[0].shape
    needs_pad = HWp != HW

    neg_mask = neg_mask_ref[...]                         # (TB, K, 1) in {0,1}
    onehot = onehot_ref[...]                             # (TB, K, 1) in {0,1}
    bvalid = jnp.sum(onehot, axis=1)                     # (TB, 1): 1 real / 0 pad

    if needs_pad:
        lane = jax.lax.broadcasted_iota(jnp.int32, (TB, K, HWp), 2)
        valid = lane < HW

    neg_acc = jnp.float32(0.0)
    plogp = jnp.float32(0.0)
    p_sum = jnp.zeros((TB, HWp), jnp.float32)

    for a in range(A):
        xs = cam_refs[a][...] * inv_T                    # (TB, K, HWp)
        mx = jnp.max(xs, axis=-1, keepdims=True)         # (TB, K, 1)
        e = jnp.exp(xs - mx)                             # pad lanes -> 0 exactly
        se = jnp.sum(e, axis=-1, keepdims=True)          # (TB, K, 1)
        lse = jnp.log(se) + mx                           # (TB, K, 1)

        # ---- negative path: sum_{k in top3} [ lse_k - mean_j(xs_kj) ] ------
        xs_for_sum = jnp.where(valid, xs, 0.0) if needs_pad else xs
        mean_xs = jnp.sum(xs_for_sum, axis=-1, keepdims=True) * inv_HW
        neg_acc = neg_acc + jnp.sum(neg_mask * (lse - mean_xs))

        # ---- positive path: true-class row taken from the resident block ---
        xs_t = jnp.sum(xs * onehot, axis=1)              # (TB, HWp)
        mx_t = jnp.sum(mx * onehot, axis=1)              # (TB, 1)
        se_t = jnp.sum(se * onehot, axis=1)              # (TB, 1)
        lse_t = jnp.sum(lse * onehot, axis=1)            # (TB, 1)
        scale = bvalid / (se_t + (1.0 - bvalid))         # 0 (safely) for pad rows
        p = jnp.exp(xs_t - mx_t) * scale                 # softmax of true row
        logp = xs_t - lse_t                              # exact log_softmax
        plogp = plogp + jnp.sum(p * logp)
        p_sum = p_sum + p

    mix = jnp.clip(p_sum * (1.0 / A), eps, 1.0)
    pos_acc = plogp - jnp.sum(p_sum * jnp.log(mix))      # 0 * finite == 0

    # Single lane-dense full-tile store: neg in row 0, pos in row 1.
    row = jax.lax.broadcasted_iota(jnp.int32, (1, 8, 128), 1)
    out_ref[...] = jnp.where(row == 0, neg_acc,
                             jnp.where(row == 1, pos_acc, 0.0))


def _choose_batch_block(B, K, HWp, A):
    """Pick TB: >= ~2 MiB of CAM data per step, grid >= 2, VMEM-safe on v5e/v7x."""
    bytes_per_b = A * K * HWp * 4
    tb = max(1, (2 << 20) // max(bytes_per_b, 1))
    if B >= 2:
        tb = min(tb, B // 2)          # keep >= 2 grid steps for megacore sharding
    tb = max(1, min(tb, B))
    # keep double-buffered per-step inputs comfortably under v5e's 16 MiB scoped
    # VMEM default (also well inside v7x's 32 MiB scoped / 64 MiB physical).
    while tb > 1 and 2 * tb * bytes_per_b > (12 << 20):
        tb = (tb + 1) // 2
    return tb


# ---------------------------------------------------------------------------
# Forward pass of AttentionConsistency.
# ---------------------------------------------------------------------------
def attention_consistency(c, ci_list, y, *, lambd=0.06, T=1.0, batch_block=None):
    A = 1 + len(ci_list)
    B, K, H, W = c.shape
    HW = H * W
    HWp = ((HW + 127) // 128) * 128   # lane-dense spatial axis

    def prep(x):
        r = x.astype(jnp.float32).reshape(B, K, HW)
        if HWp != HW:
            r = jnp.pad(r, ((0, 0), (0, 0), (0, HWp - HW)), constant_values=_NEG)
        return r

    cams = [prep(c)] + [prep(ci) for ci in ci_list]
    y = y.astype(jnp.int32)

    # top-3 non-true classes from the clean CAM's spatial sums (tiny; done in XLA).
    c1 = c.astype(jnp.float32).sum(axis=(2, 3))                      # (B, K)
    c1 = c1.at[jnp.arange(B), y].set(-jnp.inf)
    topk_ind = jax.lax.top_k(c1, 3)[1]                               # (B, 3)
    neg_mask = (jnp.zeros((B, K), jnp.float32)
                .at[jnp.arange(B)[:, None], topk_ind].set(1.0))
    pos_onehot = jax.nn.one_hot(y, K, dtype=jnp.float32)             # (B, K)

    TB = batch_block or _choose_batch_block(B, K, HWp, A)
    nsteps = pl.cdiv(B, TB)
    B_pad = nsteps * TB
    if B_pad != B:
        pad3 = ((0, B_pad - B), (0, 0), (0, 0))
        cams = [jnp.pad(x, pad3) for x in cams]
        neg_mask = jnp.pad(neg_mask, ((0, B_pad - B), (0, 0)))
        pos_onehot = jnp.pad(pos_onehot, ((0, B_pad - B), (0, 0)))
    neg_mask = neg_mask[..., None]                                   # (B_pad, K, 1)
    pos_onehot = pos_onehot[..., None]                               # (B_pad, K, 1)

    kernel = functools.partial(
        _acvc_kernel, A=A, inv_T=float(1.0 / T), inv_HW=float(1.0 / HW),
        HW=HW, eps=1e-7)

    cam_spec = pl.BlockSpec((TB, K, HWp), lambda s: (s, 0, 0))
    msk_spec = pl.BlockSpec((TB, K, 1), lambda s: (s, 0, 0))
    out_spec = pl.BlockSpec((1, 8, 128), lambda s: (s, 0, 0))

    out = pl.pallas_call(
        kernel,
        out_shape=jax.ShapeDtypeStruct((nsteps, 8, 128), jnp.float32),
        grid_spec=pltpu.PrefetchScalarGridSpec(
            num_scalar_prefetch=0,
            grid=(nsteps,),
            in_specs=[cam_spec] * A + [msk_spec, msk_spec],
            out_specs=out_spec,
        ),
        compiler_params=pltpu.CompilerParams(
            dimension_semantics=("parallel",),
        ),
    )(*cams, neg_mask, pos_onehot)

    total = jnp.sum(out[:, 0, 0]) + jnp.sum(out[:, 1, 0])
    return lambd * total / (B * A)


# ---------------------------------------------------------------------------
# Pure-JAX reference (mirrors the PyTorch module) for a correctness check.
# ---------------------------------------------------------------------------
def _reference(c, ci_list, y, lambd, T):
    B, K, H, W = c.shape
    HW = H * W

    def cam_neg(x):
        r = x.reshape(B, K, HW)
        return jnp.sum(-jax.nn.log_softmax(r / T, axis=2) / HW, axis=2)

    def cam_pos(x):
        r = x.reshape(B, K, HW)
        return jax.nn.softmax(r / T, axis=2)

    c0 = cam_neg(c)
    c1 = c.sum(axis=(2, 3))
    c1 = c1.at[jnp.arange(B), y].set(-jnp.inf)
    topk_ind = jax.lax.top_k(c1, 3)[1]
    mask = (
        jnp.zeros((B, K), dtype=bool)
        .at[jnp.arange(B)[:, None], topk_ind]
        .set(True)
    )
    neg = jnp.sum(jnp.where(mask, c0, 0.0)) / B
    for ci in ci_list:
        neg += jnp.sum(jnp.where(mask, cam_neg(ci), 0.0)) / B
    neg /= len(ci_list) + 1

    p0 = cam_pos(c)[jnp.arange(B), y]
    pis = [cam_pos(ci)[jnp.arange(B), y] for ci in ci_list]
    pc = 1 + len(pis)
    mix = p0
    for pi in pis:
        mix = mix + pi
    log_m = jnp.log(jnp.clip(mix / pc, 1e-7, 1.0))

    def kld(lm, p):
        return jnp.sum(p * (jnp.log(p) - lm)) / B

    pos = kld(log_m, p0)
    for pi in pis:
        pos += kld(log_m, pi)
    pos /= pc
    return lambd * (pos + neg)


if __name__ == "__main__":
    key = jax.random.PRNGKey(0)
    B, K, H, W = 2, 8, 16, 16          # batch, num_classes, feature-map H, W
    k1, k2, k3, k4 = jax.random.split(key, 4)

    c = jax.random.normal(k1, (B, K, H, W), jnp.float32)
    ci_list = [
        jax.random.normal(k2, (B, K, H, W), jnp.float32),
        jax.random.normal(k3, (B, K, H, W), jnp.float32),
    ]
    y = jax.random.randint(k4, (B,), 0, K)

    loss_fn = jax.jit(attention_consistency, static_argnames=("lambd", "T"))
    loss = loss_fn(c, ci_list, y, lambd=0.06, T=1.0)
    loss = jax.block_until_ready(loss)

    ref = _reference(c, ci_list, y, 0.06, 1.0)
    assert jnp.allclose(loss, ref, rtol=2e-4, atol=1e-5), (loss, ref)

    print("KERNEL_OK")
</pallas_src>

<mosaic_0001>
module attributes {stable_mosaic.version = 11 : i64} {
  func.func @_acvc_kernel(%arg0: i32, %arg1: memref<1x8x256xf32, #tpu.memory_space<vmem>>, %arg2: memref<1x8x256xf32, #tpu.memory_space<vmem>>, %arg3: memref<1x8x256xf32, #tpu.memory_space<vmem>>, %arg4: memref<1x8x1xf32, #tpu.memory_space<vmem>>, %arg5: memref<1x8x1xf32, #tpu.memory_space<vmem>>, %arg6: memref<1x8x128xf32, #tpu.memory_space<vmem>>) attributes {dimension_semantics = [#tpu.dimension_semantics<parallel>], iteration_bounds = array<i64: 2>, scalar_prefetch = 0 : i64, scratch_operands = 0 : i64, tpu.core_type = #tpu.core_type<tc>, window_params = [{transform_indices = @transform_0, window_bounds = array<i64: 1, 8, 256>}, {transform_indices = @transform_1, window_bounds = array<i64: 1, 8, 256>}, {transform_indices = @transform_2, window_bounds = array<i64: 1, 8, 256>}, {transform_indices = @transform_3, window_bounds = array<i64: 1, 8, 1>}, {transform_indices = @transform_4, window_bounds = array<i64: 1, 8, 1>}, {transform_indices = @transform_5, window_bounds = array<i64: 1, 8, 128>}]} {
    %c0 = arith.constant 0 : index
    %c0_0 = arith.constant 0 : index
    %c0_1 = arith.constant 0 : index
    %0 = vector.load %arg4[%c0, %c0_0, %c0_1] : memref<1x8x1xf32, #tpu.memory_space<vmem>>, vector<1x8x1xf32>
    %c0_2 = arith.constant 0 : index
    %c0_3 = arith.constant 0 : index
    %c0_4 = arith.constant 0 : index
    %1 = vector.load %arg5[%c0_2, %c0_3, %c0_4] : memref<1x8x1xf32, #tpu.memory_space<vmem>>, vector<1x8x1xf32>
    %cst = arith.constant dense<0.000000e+00> : vector<1x1xf32>
    %2 = vector.multi_reduction <add>, %1, %cst [1] : vector<1x8x1xf32> to vector<1x1xf32>
    %cst_5 = arith.constant 0.000000e+00 : f32
    %3 = vector.broadcast %cst_5 : f32 to vector<1x256xf32>
    %c0_6 = arith.constant 0 : index
    %c0_7 = arith.constant 0 : index
    %c0_8 = arith.constant 0 : index
    %4 = vector.load %arg1[%c0_6, %c0_7, %c0_8] : memref<1x8x256xf32, #tpu.memory_space<vmem>>, vector<1x8x256xf32>
    %cst_9 = arith.constant 1.000000e+00 : f32
    %5 = vector.broadcast %cst_9 : f32 to vector<1x8x256xf32>
    %6 = arith.mulf %4, %5 : vector<1x8x256xf32>
    %cst_10 = arith.constant dense<0xFF800000> : vector<1x8xf32>
    %7 = vector.multi_reduction <maximumf>, %6, %cst_10 [2] : vector<1x8x256xf32> to vector<1x8xf32>
    %8 = vector.shape_cast %7 : vector<1x8xf32> to vector<1x8x1xf32>
    %9 = vector.broadcast %8 : vector<1x8x1xf32> to vector<1x8x256xf32>
    %10 = arith.subf %6, %9 : vector<1x8x256xf32>
    %11 = math.exp %10 : vector<1x8x256xf32>
    %cst_11 = arith.constant dense<0.000000e+00> : vector<1x8xf32>
    %12 = vector.multi_reduction <add>, %11, %cst_11 [2] : vector<1x8x256xf32> to vector<1x8xf32>
    %13 = vector.shape_cast %12 : vector<1x8xf32> to vector<1x8x1xf32>
    %14 = math.log %13 : vector<1x8x1xf32>
    %15 = arith.addf %14, %8 : vector<1x8x1xf32>
    %cst_12 = arith.constant dense<0.000000e+00> : vector<1x8xf32>
    %16 = vector.multi_reduction <add>, %6, %cst_12 [2] : vector<1x8x256xf32> to vector<1x8xf32>
    %17 = vector.shape_cast %16 : vector<1x8xf32> to vector<1x8x1xf32>
    %cst_13 = arith.constant 3.906250e-03 : f32
    %18 = vector.broadcast %cst_13 : f32 to vector<1x8x1xf32>
    %19 = arith.mulf %17, %18 : vector<1x8x1xf32>
    %20 = arith.subf %15, %19 : vector<1x8x1xf32>
    %21 = arith.mulf %0, %20 : vector<1x8x1xf32>
    %22 = vector.shape_cast %21 : vector<1x8x1xf32> to vector<1x1x8x1xf32>
    %cst_14 = arith.constant dense<0.000000e+00> : vector<1xf32>
    %23 = vector.multi_reduction <add>, %22, %cst_14 [1, 2, 3] : vector<1x1x8x1xf32> to vector<1xf32>
    %24 = vector.shape_cast %23 : vector<1xf32> to vector<1x1x1x1xf32>
    %25 = vector.extract %24[0, 0, 0, 0] : f32 from vector<1x1x1x1xf32>
    %cst_15 = arith.constant 0.000000e+00 : f32
    %26 = arith.addf %cst_15, %25 : f32
    %27 = vector.broadcast %1 : vector<1x8x1xf32> to vector<1x8x256xf32>
    %28 = arith.mulf %6, %27 : vector<1x8x256xf32>
    %cst_16 = arith.constant dense<0.000000e+00> : vector<1x256xf32>
    %29 = vector.multi_reduction <add>, %28, %cst_16 [1] : vector<1x8x256xf32> to vector<1x256xf32>
    %30 = arith.mulf %8, %1 : vector<1x8x1xf32>
    %cst_17 = arith.constant dense<0.000000e+00> : vector<1x1xf32>
    %31 = vector.multi_reduction <add>, %30, %cst_17 [1] : vector<1x8x1xf32> to vector<1x1xf32>
    %32 = arith.mulf %13, %1 : vector<1x8x1xf32>
    %cst_18 = arith.constant dense<0.000000e+00> : vector<1x1xf32>
    %33 = vector.multi_reduction <add>, %32, %cst_18 [1] : vector<1x8x1xf32> to vector<1x1xf32>
    %34 = arith.mulf %15, %1 : vector<1x8x1xf32>
    %cst_19 = arith.constant dense<0.000000e+00> : vector<1x1xf32>
    %35 = vector.multi_reduction <add>, %34, %cst_19 [1] : vector<1x8x1xf32> to vector<1x1xf32>
    %cst_20 = arith.constant 1.000000e+00 : f32
    %36 = vector.broadcast %cst_20 : f32 to vector<1x1xf32>
    %37 = arith.subf %36, %2 : vector<1x1xf32>
    %38 = arith.addf %33, %37 : vector<1x1xf32>
    %39 = arith.divf %2, %38 : vector<1x1xf32>
    %40 = vector.broadcast %31 : vector<1x1xf32> to vector<1x256xf32>
    %41 = arith.subf %29, %40 : vector<1x256xf32>
    %42 = math.exp %41 : vector<1x256xf32>
    %43 = vector.broadcast %39 : vector<1x1xf32> to vector<1x256xf32>
    %44 = arith.mulf %42, %43 : vector<1x256xf32>
    %45 = vector.broadcast %35 : vector<1x1xf32> to vector<1x256xf32>
    %46 = arith.subf %29, %45 : vector<1x256xf32>
    %47 = arith.mulf %44, %46 : vector<1x256xf32>
    %48 = vector.shape_cast %47 : vector<1x256xf32> to vector<1x1x256xf32>
    %cst_21 = arith.constant dense<0.000000e+00> : vector<1xf32>
    %49 = vector.multi_reduction <add>, %48, %cst_21 [1, 2] : vector<1x1x256xf32> to vector<1xf32>
    %50 = vector.shape_cast %49 : vector<1xf32> to vector<1x1x1xf32>
    %51 = vector.extract %50[0, 0, 0] : f32 from vector<1x1x1xf32>
    %cst_22 = arith.constant 0.000000e+00 : f32
    %52 = arith.addf %cst_22, %51 : f32
    %53 = arith.addf %3, %44 : vector<1x256xf32>
    %c0_23 = arith.constant 0 : index
    %c0_24 = arith.constant 0 : index
    %c0_25 = arith.constant 0 : index
    %54 = vector.load %arg2[%c0_23, %c0_24, %c0_25] : memref<1x8x256xf32, #tpu.memory_space<vmem>>, vector<1x8x256xf32>
    %cst_26 = arith.constant 1.000000e+00 : f32
    %55 = vector.broadcast %cst_26 : f32 to vector<1x8x256xf32>
    %56 = arith.mulf %54, %55 : vector<1x8x256xf32>
    %cst_27 = arith.constant dense<0xFF800000> : vector<1x8xf32>
    %57 = vector.multi_reduction <maximumf>, %56, %cst_27 [2] : vector<1x8x256xf32> to vector<1x8xf32>
    %58 = vector.shape_cast %57 : vector<1x8xf32> to vector<1x8x1xf32>
    %59 = vector.broadcast %58 : vector<1x8x1xf32> to vector<1x8x256xf32>
    %60 = arith.subf %56, %59 : vector<1x8x256xf32>
    %61 = math.exp %60 : vector<1x8x256xf32>
    %cst_28 = arith.constant dense<0.000000e+00> : vector<1x8xf32>
    %62 = vector.multi_reduction <add>, %61, %cst_28 [2] : vector<1x8x256xf32> to vector<1x8xf32>
    %63 = vector.shape_cast %62 : vector<1x8xf32> to vector<1x8x1xf32>
    %64 = math.log %63 : vector<1x8x1xf32>
    %65 = arith.addf %64, %58 : vector<1x8x1xf32>
    %cst_29 = arith.constant dense<0.000000e+00> : vector<1x8xf32>
    %66 = vector.multi_reduction <add>, %56, %cst_29 [2] : vector<1x8x256xf32> to vector<1x8xf32>
    %67 = vector.shape_cast %66 : vector<1x8xf32> to vector<1x8x1xf32>
    %cst_30 = arith.constant 3.906250e-03 : f32
    %68 = vector.broadcast %cst_30 : f32 to vector<1x8x1xf32>
    %69 = arith.mulf %67, %68 : vector<1x8x1xf32>
    %70 = arith.subf %65, %69 : vector<1x8x1xf32>
    %71 = arith.mulf %0, %70 : vector<1x8x1xf32>
    %72 = vector.shape_cast %71 : vector<1x8x1xf32> to vector<1x1x8x1xf32>
    %cst_31 = arith.constant dense<0.000000e+00> : vector<1xf32>
    %73 = vector.multi_reduction <add>, %72, %cst_31 [1, 2, 3] : vector<1x1x8x1xf32> to vector<1xf32>
    %74 = vector.shape_cast %73 : vector<1xf32> to vector<1x1x1x1xf32>
    %75 = vector.extract %74[0, 0, 0, 0] : f32 from vector<1x1x1x1xf32>
    %76 = arith.addf %26, %75 : f32
    %77 = vector.broadcast %1 : vector<1x8x1xf32> to vector<1x8x256xf32>
    %78 = arith.mulf %56, %77 : vector<1x8x256xf32>
    %cst_32 = arith.constant dense<0.000000e+00> : vector<1x256xf32>
    %79 = vector.multi_reduction <add>, %78, %cst_32 [1] : vector<1x8x256xf32> to vector<1x256xf32>
    %80 = arith.mulf %58, %1 : vector<1x8x1xf32>
    %cst_33 = arith.constant dense<0.000000e+00> : vector<1x1xf32>
    %81 = vector.multi_reduction <add>, %80, %cst_33 [1] : vector<1x8x1xf32> to vector<1x1xf32>
    %82 = arith.mulf %63, %1 : vector<1x8x1xf32>
    %cst_34 = arith.constant dense<0.000000e+00> : vector<1x1xf32>
    %83 = vector.multi_reduction <add>, %82, %cst_34 [1] : vector<1x8x1xf32> to vector<1x1xf32>
    %84 = arith.mulf %65, %1 : vector<1x8x1xf32>
    %cst_35 = arith.constant dense<0.000000e+00> : vector<1x1xf32>
    %85 = vector.multi_reduction <add>, %84, %cst_35 [1] : vector<1x8x1xf32> to vector<1x1xf32>
    %cst_36 = arith.constant 1.000000e+00 : f32
    %86 = vector.broadcast %cst_36 : f32 to vector<1x1xf32>
    %87 = arith.subf %86, %2 : vector<1x1xf32>
    %88 = arith.addf %83, %87 : vector<1x1xf32>
    %89 = arith.divf %2, %88 : vector<1x1xf32>
    %90 = vector.broadcast %81 : vector<1x1xf32> to vector<1x256xf32>
    %91 = arith.subf %79, %90 : vector<1x256xf32>
    %92 = math.exp %91 : vector<1x256xf32>
    %93 = vector.broadcast %89 : vector<1x1xf32> to vector<1x256xf32>
    %94 = arith.mulf %92, %93 : vector<1x256xf32>
    %95 = vector.broadcast %85 : vector<1x1xf32> to vector<1x256xf32>
    %96 = arith.subf %79, %95 : vector<1x256xf32>
    %97 = arith.mulf %94, %96 : vector<1x256xf32>
    %98 = vector.shape_cast %97 : vector<1x256xf32> to vector<1x1x256xf32>
    %cst_37 = arith.constant dense<0.000000e+00> : vector<1xf32>
    %99 = vector.multi_reduction <add>, %98, %cst_37 [1, 2] : vector<1x1x256xf32> to vector<1xf32>
    %100 = vector.shape_cast %99 : vector<1xf32> to vector<1x1x1xf32>
    %101 = vector.extract %100[0, 0, 0] : f32 from vector<1x1x1xf32>
    %102 = arith.addf %52, %101 : f32
    %103 = arith.addf %53, %94 : vector<1x256xf32>
    %c0_38 = arith.constant 0 : index
    %c0_39 = arith.constant 0 : index
    %c0_40 = arith.constant 0 : index
    %104 = vector.load %arg3[%c0_38, %c0_39, %c0_40] : memref<1x8x256xf32, #tpu.memory_space<vmem>>, vector<1x8x256xf32>
    %cst_41 = arith.constant 1.000000e+00 : f32
    %105 = vector.broadcast %cst_41 : f32 to vector<1x8x256xf32>
    %106 = arith.mulf %104, %105 : vector<1x8x256xf32>
    %cst_42 = arith.constant dense<0xFF800000> : vector<1x8xf32>
    %107 = vector.multi_reduction <maximumf>, %106, %cst_42 [2] : vector<1x8x256xf32> to vector<1x8xf32>
    %108 = vector.shape_cast %107 : vector<1x8xf32> to vector<1x8x1xf32>
    %109 = vector.broadcast %108 : vector<1x8x1xf32> to vector<1x8x256xf32>
    %110 = arith.subf %106, %109 : vector<1x8x256xf32>
    %111 = math.exp %110 : vector<1x8x256xf32>
    %cst_43 = arith.constant dense<0.000000e+00> : vector<1x8xf32>
    %112 = vector.multi_reduction <add>, %111, %cst_43 [2] : vector<1x8x256xf32> to vector<1x8xf32>
    %113 = vector.shape_cast %112 : vector<1x8xf32> to vector<1x8x1xf32>
    %114 = math.log %113 : vector<1x8x1xf32>
    %115 = arith.addf %114, %108 : vector<1x8x1xf32>
    %cst_44 = arith.constant dense<0.000000e+00> : vector<1x8xf32>
    %116 = vector.multi_reduction <add>, %106, %cst_44 [2] : vector<1x8x256xf32> to vector<1x8xf32>
    %117 = vector.shape_cast %116 : vector<1x8xf32> to vector<1x8x1xf32>
    %cst_45 = arith.constant 3.906250e-03 : f32
    %118 = vector.broadcast %cst_45 : f32 to vector<1x8x1xf32>
    %119 = arith.mulf %117, %118 : vector<1x8x1xf32>
    %120 = arith.subf %115, %119 : vector<1x8x1xf32>
    %121 = arith.mulf %0, %120 : vector<1x8x1xf32>
    %122 = vector.shape_cast %121 : vector<1x8x1xf32> to vector<1x1x8x1xf32>
    %cst_46 = arith.constant dense<0.000000e+00> : vector<1xf32>
    %123 = vector.multi_reduction <add>, %122, %cst_46 [1, 2, 3] : vector<1x1x8x1xf32> to vector<1xf32>
    %124 = vector.shape_cast %123 : vector<1xf32> to vector<1x1x1x1xf32>
    %125 = vector.extract %124[0, 0, 0, 0] : f32 from vector<1x1x1x1xf32>
    %126 = arith.addf %76, %125 : f32
    %127 = vector.broadcast %1 : vector<1x8x1xf32> to vector<1x8x256xf32>
    %128 = arith.mulf %106, %127 : vector<1x8x256xf32>
    %cst_47 = arith.constant dense<0.000000e+00> : vector<1x256xf32>
    %129 = vector.multi_reduction <add>, %128, %cst_47 [1] : vector<1x8x256xf32> to vector<1x256xf32>
    %130 = arith.mulf %108, %1 : vector<1x8x1xf32>
    %cst_48 = arith.constant dense<0.000000e+00> : vector<1x1xf32>
    %131 = vector.multi_reduction <add>, %130, %cst_48 [1] : vector<1x8x1xf32> to vector<1x1xf32>
    %132 = arith.mulf %113, %1 : vector<1x8x1xf32>
    %cst_49 = arith.constant dense<0.000000e+00> : vector<1x1xf32>
    %133 = vector.multi_reduction <add>, %132, %cst_49 [1] : vector<1x8x1xf32> to vector<1x1xf32>
    %134 = arith.mulf %115, %1 : vector<1x8x1xf32>
    %cst_50 = arith.constant dense<0.000000e+00> : vector<1x1xf32>
    %135 = vector.multi_reduction <add>, %134, %cst_50 [1] : vector<1x8x1xf32> to vector<1x1xf32>
    %cst_51 = arith.constant 1.000000e+00 : f32
    %136 = vector.broadcast %cst_51 : f32 to vector<1x1xf32>
    %137 = arith.subf %136, %2 : vector<1x1xf32>
    %138 = arith.addf %133, %137 : vector<1x1xf32>
    %139 = arith.divf %2, %138 : vector<1x1xf32>
    %140 = vector.broadcast %131 : vector<1x1xf32> to vector<1x256xf32>
    %141 = arith.subf %129, %140 : vector<1x256xf32>
    %142 = math.exp %141 : vector<1x256xf32>
    %143 = vector.broadcast %139 : vector<1x1xf32> to vector<1x256xf32>
    %144 = arith.mulf %142, %143 : vector<1x256xf32>
    %145 = vector.broadcast %135 : vector<1x1xf32> to vector<1x256xf32>
    %146 = arith.subf %129, %145 : vector<1x256xf32>
    %147 = arith.mulf %144, %146 : vector<1x256xf32>
    %148 = vector.shape_cast %147 : vector<1x256xf32> to vector<1x1x256xf32>
    %cst_52 = arith.constant dense<0.000000e+00> : vector<1xf32>
    %149 = vector.multi_reduction <add>, %148, %cst_52 [1, 2] : vector<1x1x256xf32> to vector<1xf32>
    %150 = vector.shape_cast %149 : vector<1xf32> to vector<1x1x1xf32>
    %151 = vector.extract %150[0, 0, 0] : f32 from vector<1x1x1xf32>
    %152 = arith.addf %102, %151 : f32
    %153 = arith.addf %103, %144 : vector<1x256xf32>
    %cst_53 = arith.constant 0.333333343 : f32
    %154 = vector.broadcast %cst_53 : f32 to vector<1x256xf32>
    %155 = arith.mulf %153, %154 : vector<1x256xf32>
    %cst_54 = arith.constant 1.000000e-07 : f32
    %cst_55 = arith.constant 1.000000e+00 : f32
    %156 = vector.broadcast %cst_54 : f32 to vector<1x256xf32>
    %157 = arith.maximumf %156, %155 : vector<1x256xf32>
    %158 = vector.broadcast %cst_55 : f32 to vector<1x256xf32>
    %159 = arith.minimumf %158, %157 : vector<1x256xf32>
    %160 = math.log %159 : vector<1x256xf32>
    %161 = arith.mulf %153, %160 : vector<1x256xf32>
    %162 = vector.shape_cast %161 : vector<1x256xf32> to vector<1x1x256xf32>
    %cst_56 = arith.constant dense<0.000000e+00> : vector<1xf32>
    %163 = vector.multi_reduction <add>, %162, %cst_56 [1, 2] : vector<1x1x256xf32> to vector<1xf32>
    %164 = vector.shape_cast %163 : vector<1xf32> to vector<1x1x1xf32>
    %165 = vector.extract %164[0, 0, 0] : f32 from vector<1x1x1xf32>
    %166 = arith.subf %152, %165 : f32
    %167 = tpu.iota {dimensions = array<i32: 1>} : vector<1x8x128xi32>
    %c0_i32 = arith.constant 0 : i32
    %168 = vector.broadcast %c0_i32 : i32 to vector<1x8x128xi32>
    %169 = arith.cmpi eq, %167, %168 : vector<1x8x128xi32>
    %c1_i32 = arith.constant 1 : i32
    %170 = vector.broadcast %c1_i32 : i32 to vector<1x8x128xi32>
    %171 = arith.cmpi eq, %167, %170 : vector<1x8x128xi32>
    %cst_57 = arith.constant 0.000000e+00 : f32
    %172 = vector.broadcast %166 : f32 to vector<1x8x128xf32>
    %173 = vector.broadcast %cst_57 : f32 to vector<1x8x128xf32>
    %174 = arith.select %171, %172, %173 : vector<1x8x128xi1>, vector<1x8x128xf32>
    %175 = vector.broadcast %126 : f32 to vector<1x8x128xf32>
    %176 = arith.select %169, %175, %174 : vector<1x8x128xi1>, vector<1x8x128xf32>
    %c0_58 = arith.constant 0 : index
    %c0_59 = arith.constant 0 : index
    %c0_60 = arith.constant 0 : index
    %177 = vector.load %arg6[%c0_58, %c0_59, %c0_60] : memref<1x8x128xf32, #tpu.memory_space<vmem>>, vector<1x8x128xf32>
    tpu.vector_store %arg6[%c0_58, %c0_59, %c0_60], %176 {strides = array<i32>} : memref<1x8x128xf32, #tpu.memory_space<vmem>>, vector<1x8x128xf32>,
    return
  }
  func.func @transform_0(%arg0: i32) -> (i32, i32, i32) {
    %c0_i32 = arith.constant 0 : i32
    %c0_i32_0 = arith.constant 0 : i32
    %c0_i32_1 = arith.constant 0 : i32
    return %arg0, %c0_i32, %c0_i32_0 : i32, i32, i32
  }
  func.func @transform_1(%arg0: i32) -> (i32, i32, i32) {
    %c0_i32 = arith.constant 0 : i32
    %c0_i32_0 = arith.constant 0 : i32
    %c0_i32_1 = arith.constant 0 : i32
    return %arg0, %c0_i32, %c0_i32_0 : i32, i32, i32
  }
  func.func @transform_2(%arg0: i32) -> (i32, i32, i32) {
    %c0_i32 = arith.constant 0 : i32
    %c0_i32_0 = arith.constant 0 : i32
    %c0_i32_1 = arith.constant 0 : i32
    return %arg0, %c0_i32, %c0_i32_0 : i32, i32, i32
  }
  func.func @transform_3(%arg0: i32) -> (i32, i32, i32) {
    %c0_i32 = arith.constant 0 : i32
    %c0_i32_0 = arith.constant 0 : i32
    %c0_i32_1 = arith.constant 0 : i32
    return %arg0, %c0_i32, %c0_i32_0 : i32, i32, i32
  }
  func.func @transform_4(%arg0: i32) -> (i32, i32, i32) {
    %c0_i32 = arith.constant 0 : i32
    %c0_i32_0 = arith.constant 0 : i32
    %c0_i32_1 = arith.constant 0 : i32
    return %arg0, %c0_i32, %c0_i32_0 : i32, i32, i32
  }
  func.func @transform_5(%arg0: i32) -> (i32, i32, i32) {
    %c0_i32 = arith.constant 0 : i32
    %c0_i32_0 = arith.constant 0 : i32
    %c0_i32_1 = arith.constant 0 : i32
    return %arg0, %c0_i32, %c0_i32_0 : i32, i32, i32
  }
}

</mosaic_0001>

<llo_original>
// kernel: attention_consistency.1
$region0: #{attention_consistency.1}
  #allocation0 [shape = 'u32[]', space=smem, size = 0x4, offset = 0x4, fixed_abs, tag = 'smem constant byte address 0x4 - core index']
  #allocation1 [shape = 'u32[144,128]{1,0:T(1,128)}', space=vmem, size = 0x12000, scoped, tag = 'internal scratch']
  %s0 = inlined_call_operand.vmem [shape: f32[2,8,256], index: 0, kind: input, shape index: {}]
  %s1 = inlined_call_operand.vmem [shape: f32[2,8,256], index: 1, kind: input, shape index: {}]
  %s2 = inlined_call_operand.vmem [shape: f32[2,8,256], index: 2, kind: input, shape index: {}]
  %s3 = inlined_call_operand.vmem [shape: f32[2,8,1], index: 3, kind: input, shape index: {}]
  %s4 = inlined_call_operand.vmem [shape: f32[2,8,1], index: 4, kind: input, shape index: {}]
  %s5 = inlined_call_operand.vmem [shape: f32[2,8,128], index: 5, kind: output, shape index: {}]
  %s6 = sld [smem:[#allocation0]]
  $region53: #{attention_consistency.1} parent=0
    _
  %s8 = ssub.s32 1, %s6
  %s9 = scalar_select 0, %s8, %s6
  loop: start=0, step=1, limit=4
  $region2: #{attention_consistency.1} parent=0 // loop_pre_header
    _
  $region3: #{attention_consistency.1} parent=0 // loop_header
    %s11 = sphi 0, %s15
    %p12 = scmp.ge.s32.totalorder %s11, 4
    %s21 = sphi 0, %s23
    %s24 = sphi 0, %s21
    %s25 = sphi 0, %s24
    %s41 = sphi 0, %s25
    %s47 = sphi 0, %s49
    %s50 = sphi 0, %s47
    %s51 = sphi 0, %s50
    %s67 = sphi 0, %s51
    %s73 = sphi 0, %s75
    %s76 = sphi 0, %s73
    %s77 = sphi 0, %s76
    %s93 = sphi 0, %s77
    %s99 = sphi 0, %s101
    %s102 = sphi 0, %s99
    %s103 = sphi 0, %s102
    %s119 = sphi 0, %s103
    %s125 = sphi 0, %s127
    %s128 = sphi 0, %s125
    %s129 = sphi 0, %s128
    %s145 = sphi 0, %s129
    %s151 = sphi 0, %s153
    %s154 = sphi 0, %s151
    %s155 = sphi 0, %s154
    %s171 = sphi 0, %s155
  $region4: #{attention_consistency.1} parent=0 // loop_header_branch
    %14 = sbr.rel (%p12) target = $region8
  $region5: #{attention_consistency.1} parent=0 // loop_body
    %s16 = ssub.s32 %s11, 1
    %s17 = ssub.s32 %s11, 2
    %s18 = sadd.s32 %s11, 1
    %s19 = ssub.s32 %s11, %s18
    %p20 = scmp.eq.s32.totalorder %s19, 0
    %s22 = sadd.s32 %s21, 1
    %s23 = scalar_select %p20, %s21, %s22
    %p26 = pneg %p20
    %p27 = scmp.eq.s32.totalorder %s11, 1
    %p28 = por %p26, %p27
    %p29 = scmp.ne.s32.totalorder %s21, %s24
    %p30 = scmp.eq.s32.totalorder %s11, 0
    %p31 = por %p29, %p30
    %p32 = scmp.ne.s32.totalorder %s21, %s24
    %p33 = scmp.eq.s32.totalorder %s16, 1
    %p34 = por %p32, %p33
    %p35 = scmp.ne.s32.totalorder %s24, %s25
    %p36 = scmp.eq.s32.totalorder %s16, 0
    %p37 = por %p35, %p36
    %p38 = scmp.ne.s32.totalorder %s24, %s25
    %p39 = scmp.eq.s32.totalorder %s17, 1
    %p40 = por %p38, %p39
    %p42 = scmp.ne.s32.totalorder %s25, %s41
    %p43 = scmp.eq.s32.totalorder %s17, 0
    %p44 = por %p42, %p43
    %s45 = ssub.s32 %s11, %s18
    %p46 = scmp.eq.s32.totalorder %s45, 0
    %s48 = sadd.s32 %s47, 1
    %s49 = scalar_select %p46, %s47, %s48
    %p52 = pneg %p46
    %p53 = scmp.eq.s32.totalorder %s11, 1
    %p54 = por %p52, %p53
    %p55 = scmp.ne.s32.totalorder %s47, %s50
    %p56 = scmp.eq.s32.totalorder %s11, 0
    %p57 = por %p55, %p56
    %p58 = scmp.ne.s32.totalorder %s47, %s50
    %p59 = scmp.eq.s32.totalorder %s16, 1
    %p60 = por %p58, %p59
    %p61 = scmp.ne.s32.totalorder %s50, %s51
    %p62 = scmp.eq.s32.totalorder %s16, 0
    %p63 = por %p61, %p62
    %p64 = scmp.ne.s32.totalorder %s50, %s51
    %p65 = scmp.eq.s32.totalorder %s17, 1
    %p66 = por %p64, %p65
    %p68 = scmp.ne.s32.totalorder %s51, %s67
    %p69 = scmp.eq.s32.totalorder %s17, 0
    %p70 = por %p68, %p69
    %s71 = ssub.s32 %s11, %s18
    %p72 = scmp.eq.s32.totalorder %s71, 0
    %s74 = sadd.s32 %s73, 1
    %s75 = scalar_select %p72, %s73, %s74
    %p78 = pneg %p72
    %p79 = scmp.eq.s32.totalorder %s11, 1
    %p80 = por %p78, %p79
    %p81 = scmp.ne.s32.totalorder %s73, %s76
    %p82 = scmp.eq.s32.totalorder %s11, 0
    %p83 = por %p81, %p82
    %p84 = scmp.ne.s32.totalorder %s73, %s76
    %p85 = scmp.eq.s32.totalorder %s16, 1
    %p86 = por %p84, %p85
    %p87 = scmp.ne.s32.totalorder %s76, %s77
    %p88 = scmp.eq.s32.totalorder %s16, 0
    %p89 = por %p87, %p88
    %p90 = scmp.ne.s32.totalorder %s76, %s77
    %p91 = scmp.eq.s32.totalorder %s17, 1
    %p92 = por %p90, %p91
    %p94 = scmp.ne.s32.totalorder %s77, %s93
    %p95 = scmp.eq.s32.totalorder %s17, 0
    %p96 = por %p94, %p95
    %s97 = ssub.s32 %s11, %s18
    %p98 = scmp.eq.s32.totalorder %s97, 0
    %s100 = sadd.s32 %s99, 1
    %s101 = scalar_select %p98, %s99, %s100
    %p104 = pneg %p98
    %p105 = scmp.eq.s32.totalorder %s11, 1
    %p106 = por %p104, %p105
    %p107 = scmp.ne.s32.totalorder %s99, %s102
    %p108 = scmp.eq.s32.totalorder %s11, 0
    %p109 = por %p107, %p108
    %p110 = scmp.ne.s32.totalorder %s99, %s102
    %p111 = scmp.eq.s32.totalorder %s16, 1
    %p112 = por %p110, %p111
    %p113 = scmp.ne.s32.totalorder %s102, %s103
    %p114 = scmp.eq.s32.totalorder %s16, 0
    %p115 = por %p113, %p114
    %p116 = scmp.ne.s32.totalorder %s102, %s103
    %p117 = scmp.eq.s32.totalorder %s17, 1
    %p118 = por %p116, %p117
    %p120 = scmp.ne.s32.totalorder %s103, %s119
    %p121 = scmp.eq.s32.totalorder %s17, 0
    %p122 = por %p120, %p121
    %s123 = ssub.s32 %s11, %s18
    %p124 = scmp.eq.s32.totalorder %s123, 0
    %s126 = sadd.s32 %s125, 1
    %s127 = scalar_select %p124, %s125, %s126
    %p130 = pneg %p124
    %p131 = scmp.eq.s32.totalorder %s11, 1
    %p132 = por %p130, %p131
    %p133 = scmp.ne.s32.totalorder %s125, %s128
    %p134 = scmp.eq.s32.totalorder %s11, 0
    %p135 = por %p133, %p134
    %p136 = scmp.ne.s32.totalorder %s125, %s128
    %p137 = scmp.eq.s32.totalorder %s16, 1
    %p138 = por %p136, %p137
    %p139 = scmp.ne.s32.totalorder %s128, %s129
    %p140 = scmp.eq.s32.totalorder %s16, 0
    %p141 = por %p139, %p140
    %p142 = scmp.ne.s32.totalorder %s128, %s129
    %p143 = scmp.eq.s32.totalorder %s17, 1
    %p144 = por %p142, %p143
    %p146 = scmp.ne.s32.totalorder %s129, %s145
    %p147 = scmp.eq.s32.totalorder %s17, 0
    %p148 = por %p146, %p147
    %s149 = ssub.s32 %s11, %s18
    %p150 = scmp.eq.s32.totalorder %s149, 0
    %s152 = sadd.s32 %s151, 1
    %s153 = scalar_select %p150, %s151, %s152
    %p156 = pneg %p150
    %p157 = scmp.eq.s32.totalorder %s11, 1
    %p158 = por %p156, %p157
    %p159 = scmp.ne.s32.totalorder %s151, %s154
    %p160 = scmp.eq.s32.totalorder %s11, 0
    %p161 = por %p159, %p160
    %p162 = scmp.ne.s32.totalorder %s151, %s154
    %p163 = scmp.eq.s32.totalorder %s16, 1
    %p164 = por %p162, %p163
    %p165 = scmp.ne.s32.totalorder %s154, %s155
    %p166 = scmp.eq.s32.totalorder %s16, 0
    %p167 = por %p165, %p166
    %p168 = scmp.ne.s32.totalorder %s154, %s155
    %p169 = scmp.eq.s32.totalorder %s17, 1
    %p170 = por %p168, %p169
    %p172 = scmp.ne.s32.totalorder %s155, %s171
    %p173 = scmp.eq.s32.totalorder %s17, 0
    %p174 = por %p172, %p173
    %p175 = scmp.le.s32.totalorder 1, %s11
    %p176 = scmp.lt.s32.totalorder %s11, 3
    %p177 = pnand %p175, %p176
    %p178 = pneg %p177
    // Predicated region
    $region9: #{attention_consistency.1} parent=5 // pred_check
      _
    $region10: #{attention_consistency.1} parent=5 // pred_check_branch
      %180 = sbr.rel (%p177) target = $region12
    $region11: #{attention_consistency.1} parent=5 // pred_region
      %s181 = ssub.s32 %s11, 1
    $region12: #{attention_consistency.1} parent=5 // pred_fallthru
      _
    %p182 = scmp.lt.s32.totalorder %s11, 2
    // Predicated region
    $region13: #{attention_consistency.1} parent=5 // pred_check
      %p183 = pneg %p182
    $region14: #{attention_consistency.1} parent=5 // pred_check_branch
      %185 = sbr.rel (%p183) target = $region16
    $region15: #{attention_consistency.1} parent=5 // pred_region
      // Predicated region
      $region17: #{attention_consistency.1} parent=15 // pred_check
        %p186 = pneg %p31
      $region18: #{attention_consistency.1} parent=15 // pred_check_branch
        %188 = sbr.rel (%p186) target = $region20
      $region19: #{attention_consistency.1} parent=15 // pred_region
        %p189 = scmp.lt.s32.totalorder %s11, 1
        %s190 = scalar_select %p189, %s11, 1
        %s191 = smul.addr %s190, 2
        %s192 = smul.addr %s191, 8
        %s193 = scalar_lea.vmem %s0, %s192
      $region20: #{attention_consistency.1} parent=15 // pred_fallthru
        _
      // Predicated region
      $region21: #{attention_consistency.1} parent=15 // pred_check
        %p194 = pneg %p57
      $region22: #{attention_consistency.1} parent=15 // pred_check_branch
        %196 = sbr.rel (%p194) target = $region24
      $region23: #{attention_consistency.1} parent=15 // pred_region
        %p197 = scmp.lt.s32.totalorder %s11, 1
        %s198 = scalar_select %p197, %s11, 1
        %s199 = smul.addr %s198, 2
        %s200 = smul.addr %s199, 8
        %s201 = scalar_lea.vmem %s1, %s200
      $region24: #{attention_consistency.1} parent=15 // pred_fallthru
        _
      // Predicated region
      $region25: #{attention_consistency.1} parent=15 // pred_check
        %p202 = pneg %p83
      $region26: #{attention_consistency.1} parent=15 // pred_check_branch
        %204 = sbr.rel (%p202) target = $region28
      $region27: #{attention_consistency.1} parent=15 // pred_region
        %p205 = scmp.lt.s32.totalorder %s11, 1
        %s206 = scalar_select %p205, %s11, 1
        %s207 = smul.addr %s206, 2
        %s208 = smul.addr %s207, 8
        %s209 = scalar_lea.vmem %s2, %s208
      $region28: #{attention_consistency.1} parent=15 // pred_fallthru
        _
      // Predicated region
      $region29: #{attention_consistency.1} parent=15 // pred_check
        %p210 = pneg %p109
      $region30: #{attention_consistency.1} parent=15 // pred_check_branch
        %212 = sbr.rel (%p210) target = $region32
      $region31: #{attention_consistency.1} parent=15 // pred_region
        %p213 = scmp.lt.s32.totalorder %s11, 1
        %s214 = scalar_select %p213, %s11, 1
        %s215 = smul.addr %s214, 8
        %s216 = scalar_lea.vmem %s3, %s215
      $region32: #{attention_consistency.1} parent=15 // pred_fallthru
        _
      // Predicated region
      $region33: #{attention_consistency.1} parent=15 // pred_check
        %p217 = pneg %p135
      $region34: #{attention_consistency.1} parent=15 // pred_check_branch
        %219 = sbr.rel (%p217) target = $region36
      $region35: #{attention_consistency.1} parent=15 // pred_region
        %p220 = scmp.lt.s32.totalorder %s11, 1
        %s221 = scalar_select %p220, %s11, 1
        %s222 = smul.addr %s221, 8
        %s223 = scalar_lea.vmem %s4, %s222
      $region36: #{attention_consistency.1} parent=15 // pred_fallthru
        _
    $region16: #{attention_consistency.1} parent=5 // pred_fallthru
      _
    %p224 = scmp.le.s32.totalorder 1, %s11
    %p225 = scmp.lt.s32.totalorder %s11, 3
    %p226 = pnand %p224, %p225
    %p227 = pneg %p226
    // Predicated region
    $region37: #{attention_consistency.1} parent=5 // pred_check
      _
    $region38: #{attention_consistency.1} parent=5 // pred_check_branch
      %229 = sbr.rel (%p226) target = $region40
    $region39: #{attention_consistency.1} parent=5 // pred_region
      %s230 = ssub.s32 %s11, 1
      %p231 = scmp.lt.s32.totalorder %s16, 1
      %s232 = scalar_select %p231, %s16, 1
      %s233 = smul.addr %s232, 2
      %s234 = smul.addr %s233, 8
      %s235 = scalar_lea.vmem %s0, %s234
      %p236 = pneg %p37
      %p237 = pneg %p34
      %p238 = scmp.lt.s32.totalorder %s16, 1
      %s239 = scalar_select %p238, %s16, 1
      %s240 = smul.addr %s239, 2
      %s241 = smul.addr %s240, 8
      %s242 = scalar_lea.vmem %s1, %s241
      %p243 = pneg %p63
      %p244 = pneg %p60
      %p245 = scmp.lt.s32.totalorder %s16, 1
      %s246 = scalar_select %p245, %s16, 1
      %s247 = smul.addr %s246, 2
      %s248 = smul.addr %s247, 8
      %s249 = scalar_lea.vmem %s2, %s248
      %p250 = pneg %p89
      %p251 = pneg %p86
      %p252 = scmp.lt.s32.totalorder %s16, 1
      %s253 = scalar_select %p252, %s16, 1
      %s254 = smul.addr %s253, 8
      %s255 = scalar_lea.vmem %s3, %s254
      %p256 = pneg %p115
      %p257 = pneg %p112
      %p258 = scmp.lt.s32.totalorder %s16, 1
      %s259 = scalar_select %p258, %s16, 1
      %s260 = smul.addr %s259, 8
      %s261 = scalar_lea.vmem %s4, %s260
      %p262 = pneg %p141
      %p263 = pneg %p138
      %p264 = pneg %p167
      %p265 = pneg %p164
      %p266 = scmp.lt.s32.totalorder %s16, 1
      %s267 = scalar_select %p266, %s16, 1
      %s268 = smul.addr %s267, 8
      %s269 = scalar_lea.vmem %s5, %s268
      %p270 = scmp.lt.s32.totalorder %s16, 1
      %s271 = scalar_select %p270, %s16, 1
      %s272 = smul.addr %s271, 2
      %s273 = smul.addr %s272, 8
      %s274 = scalar_lea.vmem %s0, %s273
      %p275 = scmp.lt.s32.totalorder %s16, 1
      %s276 = scalar_select %p275, %s16, 1
      %s277 = smul.addr %s276, 2
      %s278 = smul.addr %s277, 8
      %s279 = scalar_lea.vmem %s1, %s278
      %p280 = scmp.lt.s32.totalorder %s16, 1
      %s281 = scalar_select %p280, %s16, 1
      %s282 = smul.addr %s281, 2
      %s283 = smul.addr %s282, 8
      %s284 = scalar_lea.vmem %s2, %s283
      %p285 = scmp.lt.s32.totalorder %s16, 1
      %s286 = scalar_select %p285, %s16, 1
      %s287 = smul.addr %s286, 8
      %s288 = scalar_lea.vmem %s3, %s287
      %p289 = scmp.lt.s32.totalorder %s16, 1
      %s290 = scalar_select %p289, %s16, 1
      %s291 = smul.addr %s290, 8
      %s292 = scalar_lea.vmem %s4, %s291
      %p293 = scmp.lt.s32.totalorder %s16, 1
      %s294 = scalar_select %p293, %s16, 1
      %s295 = smul.addr %s294, 8
      %s296 = scalar_lea.vmem %s5, %s295
      %v297 = vld [vmem:[%s288] sm:$0xff]
      %v298 = vld [vmem:[%s292] sm:$0xff]
      %vm299 = vcmask 7168
      %v300 = vsel %vm299, %v298, 0.0
      %v301 = vrot.slane %v300, 4
      %v302 = vadd.f32 %v300, %v301
      %v303 = vrot.slane %v302, 2
      %v304 = vadd.f32 %v302, %v303
      %v305 = vrot.slane %v304, 1
      %v306 = vadd.f32 %v304, %v305
      %v307 = vld [vmem:[%s274] sm:$0xff]
      %v308 = vld [vmem:[%s274 + $0x8] sm:$0xff]
      %v309 = vmax.f32 %v307, %v308
      %310 = vmax.xlane.f32.xlu0 %v309
      %v311 = vpop.xlane.xlu0 %310
      %v312 = vsub.f32 %v307, %v311
      %v313 = vsub.f32 %v308, %v311
      %v314 = vmul.f32 %v312, 1.442695
      %v315 = vpow.pop %v314
      %v316 = vmul.f32 %v313, 1.442695
      %v317 = vpow.pop %v316
      %v318 = vadd.f32 %v315, %v317
      %319 = vadd.xlane.f32.xlu0 %v318
      %v320 = vpop.xlane.xlu0 %319
      %v321 = vlog2.pop %v320
      %v322 = vmul.f32 %v321, 0.6931472
      %v323 = vadd.f32 %v322, %v311
      %v324 = vadd.f32 %v307, %v308
      %325 = vadd.xlane.f32.xlu0 %v324
      %v326 = vpop.xlane.xlu0 %325
      %v327 = vmul.f32 %v326, 0.00390625
      %v328 = vsub.f32 %v323, %v327
      %v329 = vmul.f32 %v297, %v328
      %v330 = vsel %vm299, %v329, 0.0
      %331 = vadd.xlane.f32.xlu0 %v330
      %v332 = vpop.xlane.xlu0 %331
      %v333 = vrot.slane %v332, 4
      %v334 = vadd.f32 %v332, %v333
      %v335 = vrot.slane %v334, 2
      %v336 = vadd.f32 %v334, %v335
      %v337 = vrot.slane %v336, 1
      %v338 = vadd.f32 %v336, %v337
      %s339 = vtos %v338
      %s340 = sadd.f32 %s339, 0.0
      %342 = vset.pattern.permute.xlu0 0
      %343 = vperm.xlu0 %342, %v298
      %v344 = vpop.permute.xlu0 %343
      %v346 = vmul.f32 %v307, %v344
      %v347 = vmul.f32 %v308, %v344
      %v348 = vrot.slane %v346, 4
      %v349 = vadd.f32 %v346, %v348
      %v350 = vrot.slane %v349, 2
      %v351 = vadd.f32 %v349, %v350
      %v352 = vrot.slane %v351, 1
      %v353 = vadd.f32 %v351, %v352
      %v354 = vrot.slane %v347, 4
      %v355 = vadd.f32 %v347, %v354
      %v356 = vrot.slane %v355, 2
      %v357 = vadd.f32 %v355, %v356
      %v358 = vrot.slane %v357, 1
      %v359 = vadd.f32 %v357, %v358
      %v360 = vmul.f32 %v311, %v298
      %v361 = vsel %vm299, %v360, 0.0
      %v362 = vrot.slane %v361, 4
      %v363 = vadd.f32 %v361, %v362
      %v364 = vrot.slane %v363, 2
      %v365 = vadd.f32 %v363, %v364
      %v366 = vrot.slane %v365, 1
      %v367 = vadd.f32 %v365, %v366
      %v368 = vmul.f32 %v320, %v298
      %v369 = vsel %vm299, %v368, 0.0
      %v370 = vrot.slane %v369, 4
      %v371 = vadd.f32 %v369, %v370
      %v372 = vrot.slane %v371, 2
      %v373 = vadd.f32 %v371, %v372
      %v374 = vrot.slane %v373, 1
      %v375 = vadd.f32 %v373, %v374
      %v376 = vmul.f32 %v323, %v298
      %v377 = vsel %vm299, %v376, 0.0
      %v378 = vrot.slane %v377, 4
      %v379 = vadd.f32 %v377, %v378
      %v380 = vrot.slane %v379, 2
      %v381 = vadd.f32 %v379, %v380
      %v382 = vrot.slane %v381, 1
      %v383 = vadd.f32 %v381, %v382
      %v384 = vsub.f32 1.0, %v306
      %v385 = vadd.f32 %v375, %v384
      %v386 = vrcp.pop %v385
      %v387 = vmul.f32 %v306, %v386
      %389 = vset.pattern.permute.xlu0 0
      %390 = vperm.xlu0 %389, %v367
      %v391 = vpop.permute.xlu0 %390
      %v393 = vsub.f32 %v353, %v391
      %v394 = vsub.f32 %v359, %v391
      %v395 = vmul.f32 %v393, 1.442695
      %v396 = vpow.pop %v395
      %v397 = vmul.f32 %v394, 1.442695
      %v398 = vpow.pop %v397
      %400 = vset.pattern.permute.xlu0 0
      %401 = vperm.xlu0 %400, %v387
      %v402 = vpop.permute.xlu0 %401
      %v404 = vmul.f32 %v396, %v402
      %v405 = vmul.f32 %v398, %v402
      %407 = vset.pattern.permute.xlu0 0
      %408 = vperm.xlu0 %407, %v383
      %v409 = vpop.permute.xlu0 %408
      %v411 = vsub.f32 %v353, %v409
      %v412 = vsub.f32 %v359, %v409
      %v413 = vmul.f32 %v404, %v411
      %v414 = vmul.f32 %v405, %v412
      %vm415 = vcmask 1040384
      %v416 = vsel %vm415, %v413, 0.0
      %v417 = vsel %vm415, %v414, 0.0
      %v418 = vadd.f32 %v416, %v417
      %419 = vadd.xlane.f32.xlu0 %v418
      %v420 = vpop.xlane.xlu0 %419
      %v421 = vrot.slane %v420, 4
      %v422 = vadd.f32 %v420, %v421
      %v423 = vrot.slane %v422, 2
      %v424 = vadd.f32 %v422, %v423
      %v425 = vrot.slane %v424, 1
      %v426 = vadd.f32 %v424, %v425
      %s427 = vtos %v426
      %s428 = sadd.f32 %s427, 0.0
      %v429 = vadd.f32 %v404, 0.0
      %v430 = vadd.f32 %v405, 0.0
      %v431 = vld [vmem:[%s279] sm:$0xff]
      %v432 = vld [vmem:[%s279 + $0x8] sm:$0xff]
      %v433 = vmax.f32 %v431, %v432
      %434 = vmax.xlane.f32.xlu0 %v433
      %v435 = vpop.xlane.xlu0 %434
      %v436 = vsub.f32 %v431, %v435
      %v437 = vsub.f32 %v432, %v435
      %v438 = vmul.f32 %v436, 1.442695
      %v439 = vpow.pop %v438
      %v440 = vmul.f32 %v437, 1.442695
      %v441 = vpow.pop %v440
      %v442 = vadd.f32 %v439, %v441
      %443 = vadd.xlane.f32.xlu0 %v442
      %v444 = vpop.xlane.xlu0 %443
      %v445 = vlog2.pop %v444
      %v446 = vmul.f32 %v445, 0.6931472
      %v447 = vadd.f32 %v446, %v435
      %v448 = vadd.f32 %v431, %v432
      %449 = vadd.xlane.f32.xlu0 %v448
      %v450 = vpop.xlane.xlu0 %449
      %v451 = vmul.f32 %v450, 0.00390625
      %v452 = vsub.f32 %v447, %v451
      %v453 = vmul.f32 %v297, %v452
      %v454 = vsel %vm299, %v453, 0.0
      %455 = vadd.xlane.f32.xlu0 %v454
      %v456 = vpop.xlane.xlu0 %455
      %v457 = vrot.slane %v456, 4
      %v458 = vadd.f32 %v456, %v457
      %v459 = vrot.slane %v458, 2
      %v460 = vadd.f32 %v458, %v459
      %v461 = vrot.slane %v460, 1
      %v462 = vadd.f32 %v460, %v461
      %s463 = vtos %v462
      %s464 = sadd.f32 %s340, %s463
      %v465 = vmul.f32 %v431, %v344
      %v466 = vmul.f32 %v432, %v344
      %v467 = vrot.slane %v465, 4
      %v468 = vadd.f32 %v465, %v467
      %v469 = vrot.slane %v468, 2
      %v470 = vadd.f32 %v468, %v469
      %v471 = vrot.slane %v470, 1
      %v472 = vadd.f32 %v470, %v471
      %v473 = vrot.slane %v466, 4
      %v474 = vadd.f32 %v466, %v473
      %v475 = vrot.slane %v474, 2
      %v476 = vadd.f32 %v474, %v475
      %v477 = vrot.slane %v476, 1
      %v478 = vadd.f32 %v476, %v477
      %v479 = vmul.f32 %v435, %v298
      %v480 = vsel %vm299, %v479, 0.0
      %v481 = vrot.slane %v480, 4
      %v482 = vadd.f32 %v480, %v481
      %v483 = vrot.slane %v482, 2
      %v484 = vadd.f32 %v482, %v483
      %v485 = vrot.slane %v484, 1
      %v486 = vadd.f32 %v484, %v485
      %v487 = vmul.f32 %v444, %v298
      %v488 = vsel %vm299, %v487, 0.0
      %v489 = vrot.slane %v488, 4
      %v490 = vadd.f32 %v488, %v489
      %v491 = vrot.slane %v490, 2
      %v492 = vadd.f32 %v490, %v491
      %v493 = vrot.slane %v492, 1
      %v494 = vadd.f32 %v492, %v493
      %v495 = vmul.f32 %v447, %v298
      %v496 = vsel %vm299, %v495, 0.0
      %v497 = vrot.slane %v496, 4
      %v498 = vadd.f32 %v496, %v497
      %v499 = vrot.slane %v498, 2
      %v500 = vadd.f32 %v498, %v499
      %v501 = vrot.slane %v500, 1
      %v502 = vadd.f32 %v500, %v501
      %v503 = vadd.f32 %v494, %v384
      %v504 = vrcp.pop %v503
      %v505 = vmul.f32 %v306, %v504
      %507 = vset.pattern.permute.xlu0 0
      %508 = vperm.xlu0 %507, %v486
      %v509 = vpop.permute.xlu0 %508
      %v511 = vsub.f32 %v472, %v509
      %v512 = vsub.f32 %v478, %v509
      %v513 = vmul.f32 %v511, 1.442695
      %v514 = vpow.pop %v513
      %v515 = vmul.f32 %v512, 1.442695
      %v516 = vpow.pop %v515
      %518 = vset.pattern.permute.xlu0 0
      %519 = vperm.xlu0 %518, %v505
      %v520 = vpop.permute.xlu0 %519
      %v522 = vmul.f32 %v514, %v520
      %v523 = vmul.f32 %v516, %v520
      %525 = vset.pattern.permute.xlu0 0
      %526 = vperm.xlu0 %525, %v502
      %v527 = vpop.permute.xlu0 %526
      %v529 = vsub.f32 %v472, %v527
      %v530 = vsub.f32 %v478, %v527
      %v531 = vmul.f32 %v522, %v529
      %v532 = vmul.f32 %v523, %v530
      %v533 = vsel %vm415, %v531, 0.0
      %v534 = vsel %vm415, %v532, 0.0
      %v535 = vadd.f32 %v533, %v534
      %536 = vadd.xlane.f32.xlu0 %v535
      %v537 = vpop.xlane.xlu0 %536
      %v538 = vrot.slane %v537, 4
      %v539 = vadd.f32 %v537, %v538
      %v540 = vrot.slane %v539, 2
      %v541 = vadd.f32 %v539, %v540
      %v542 = vrot.slane %v541, 1
      %v543 = vadd.f32 %v541, %v542
      %s544 = vtos %v543
      %s545 = sadd.f32 %s428, %s544
      %v546 = vadd.f32 %v429, %v522
      %v547 = vadd.f32 %v430, %v523
      %v548 = vld [vmem:[%s284] sm:$0xff]
      %v549 = vld [vmem:[%s284 + $0x8] sm:$0xff]
      %v550 = vmax.f32 %v548, %v549
      %551 = vmax.xlane.f32.xlu0 %v550
      %v552 = vpop.xlane.xlu0 %551
      %v553 = vsub.f32 %v548, %v552
      %v554 = vsub.f32 %v549, %v552
      %v555 = vmul.f32 %v553, 1.442695
      %v556 = vpow.pop %v555
      %v557 = vmul.f32 %v554, 1.442695
      %v558 = vpow.pop %v557
      %v559 = vadd.f32 %v556, %v558
      %560 = vadd.xlane.f32.xlu0 %v559
      %v561 = vpop.xlane.xlu0 %560
      %v562 = vlog2.pop %v561
      %v563 = vmul.f32 %v562, 0.6931472
      %v564 = vadd.f32 %v563, %v552
      %v565 = vadd.f32 %v548, %v549
      %566 = vadd.xlane.f32.xlu0 %v565
      %v567 = vpop.xlane.xlu0 %566
      %v568 = vmul.f32 %v567, 0.00390625
      %v569 = vsub.f32 %v564, %v568
      %v570 = vmul.f32 %v297, %v569
      %v571 = vsel %vm299, %v570, 0.0
      %572 = vadd.xlane.f32.xlu0 %v571
      %v573 = vpop.xlane.xlu0 %572
      %v574 = vrot.slane %v573, 4
      %v575 = vadd.f32 %v573, %v574
      %v576 = vrot.slane %v575, 2
      %v577 = vadd.f32 %v575, %v576
      %v578 = vrot.slane %v577, 1
      %v579 = vadd.f32 %v577, %v578
      %s580 = vtos %v579
      %s581 = sadd.f32 %s464, %s580
      %v582 = vmul.f32 %v548, %v344
      %v583 = vmul.f32 %v549, %v344
      %v584 = vrot.slane %v582, 4
      %v585 = vadd.f32 %v582, %v584
      %v586 = vrot.slane %v585, 2
      %v587 = vadd.f32 %v585, %v586
      %v588 = vrot.slane %v587, 1
      %v589 = vadd.f32 %v587, %v588
      %v590 = vrot.slane %v583, 4
      %v591 = vadd.f32 %v583, %v590
      %v592 = vrot.slane %v591, 2
      %v593 = vadd.f32 %v591, %v592
      %v594 = vrot.slane %v593, 1
      %v595 = vadd.f32 %v593, %v594
      %v596 = vmul.f32 %v552, %v298
      %v597 = vsel %vm299, %v596, 0.0
      %v598 = vrot.slane %v597, 4
      %v599 = vadd.f32 %v597, %v598
      %v600 = vrot.slane %v599, 2
      %v601 = vadd.f32 %v599, %v600
      %v602 = vrot.slane %v601, 1
      %v603 = vadd.f32 %v601, %v602
      %v604 = vmul.f32 %v561, %v298
      %v605 = vsel %vm299, %v604, 0.0
      %v606 = vrot.slane %v605, 4
      %v607 = vadd.f32 %v605, %v606
      %v608 = vrot.slane %v607, 2
      %v609 = vadd.f32 %v607, %v608
      %v610 = vrot.slane %v609, 1
      %v611 = vadd.f32 %v609, %v610
      %v612 = vmul.f32 %v564, %v298
      %v613 = vsel %vm299, %v612, 0.0
      %v614 = vrot.slane %v613, 4
      %v615 = vadd.f32 %v613, %v614
      %v616 = vrot.slane %v615, 2
      %v617 = vadd.f32 %v615, %v616
      %v618 = vrot.slane %v617, 1
      %v619 = vadd.f32 %v617, %v618
      %v620 = vadd.f32 %v611, %v384
      %v621 = vrcp.pop %v620
      %v622 = vmul.f32 %v306, %v621
      %624 = vset.pattern.permute.xlu0 0
      %625 = vperm.xlu0 %624, %v603
      %v626 = vpop.permute.xlu0 %625
      %v628 = vsub.f32 %v589, %v626
      %v629 = vsub.f32 %v595, %v626
      %v630 = vmul.f32 %v628, 1.442695
      %v631 = vpow.pop %v630
      %v632 = vmul.f32 %v629, 1.442695
      %v633 = vpow.pop %v632
      %635 = vset.pattern.permute.xlu0 0
      %636 = vperm.xlu0 %635, %v622
      %v637 = vpop.permute.xlu0 %636
      %v639 = vmul.f32 %v631, %v637
      %v640 = vmul.f32 %v633, %v637
      %642 = vset.pattern.permute.xlu0 0
      %643 = vperm.xlu0 %642, %v619
      %v644 = vpop.permute.xlu0 %643
      %v646 = vsub.f32 %v589, %v644
      %v647 = vsub.f32 %v595, %v644
      %v648 = vmul.f32 %v639, %v646
      %v649 = vmul.f32 %v640, %v647
      %v650 = vsel %vm415, %v648, 0.0
      %v651 = vsel %vm415, %v649, 0.0
      %v652 = vadd.f32 %v650, %v651
      %653 = vadd.xlane.f32.xlu0 %v652
      %v654 = vpop.xlane.xlu0 %653
      %v655 = vrot.slane %v654, 4
      %v656 = vadd.f32 %v654, %v655
      %v657 = vrot.slane %v656, 2
      %v658 = vadd.f32 %v656, %v657
      %v659 = vrot.slane %v658, 1
      %v660 = vadd.f32 %v658, %v659
      %s661 = vtos %v660
      %s662 = sadd.f32 %s545, %s661
      %v663 = vadd.f32 %v546, %v639
      %v664 = vadd.f32 %v547, %v640
      %v665 = vmul.f32 %v663, 0.33333334
      %v666 = vmul.f32 %v664, 0.33333334
      %v667 = vmax.f32 %v665, 1e-07
      %v668 = vmax.f32 %v666, 1e-07
      %v669 = vmin.f32 %v667, 1.0
      %v670 = vmin.f32 %v668, 1.0
      %v671 = vlog2.pop %v669
      %v672 = vmul.f32 %v671, 0.6931472
      %v673 = vlog2.pop %v670
      %v674 = vmul.f32 %v673, 0.6931472
      %v675 = vmul.f32 %v663, %v672
      %v676 = vmul.f32 %v664, %v674
      %v677 = vsel %vm415, %v675, 0.0
      %v678 = vsel %vm415, %v676, 0.0
      %v679 = vadd.f32 %v677, %v678
      %680 = vadd.xlane.f32.xlu0 %v679
      %v681 = vpop.xlane.xlu0 %680
      %v682 = vrot.slane %v681, 4
      %v683 = vadd.f32 %v681, %v682
      %v684 = vrot.slane %v683, 2
      %v685 = vadd.f32 %v683, %v684
      %v686 = vrot.slane %v685, 1
      %v687 = vadd.f32 %v685, %v686
      %s688 = vtos %v687
      %s689 = ssub.f32 %s662, %s688
      %v690 = vlaneseq
      %v691 = vshrl.u32 %v690, 7
      %vm692 = vcmp.eq.s32.totalorder %v691, 0
      %vm693 = vcmp.eq.s32.totalorder %v691, 1
      %v694 = vstv %s689
      %v695 = vsel %vm693, %v694, 0.0
      %v696 = vstv %s581
      %v697 = vsel %vm692, %v696, %v695
      %698 = vst [vmem:[%s296] sm:$0xff] %v697
      %p699 = scmp.lt.s32.totalorder %s16, 1
      %s700 = scalar_select %p699, %s16, 1
      %s701 = smul.addr %s700, 8
      %s702 = scalar_lea.vmem %s5, %s701
      // Predicated region
      $region41: #{attention_consistency.1} parent=39 // pred_check
        %p703 = pneg %p164
      $region42: #{attention_consistency.1} parent=39 // pred_check_branch
        %705 = sbr.rel (%p703) target = $region44
      $region43: #{attention_consistency.1} parent=39 // pred_region
        _
      $region44: #{attention_consistency.1} parent=39 // pred_fallthru
        _
    $region40: #{attention_consistency.1} parent=5 // pred_fallthru
      _
    %p706 = scmp.le.s32.totalorder 2, %s11
    // Predicated region
    $region45: #{attention_consistency.1} parent=5 // pred_check
      %p707 = pneg %p706
    $region46: #{attention_consistency.1} parent=5 // pred_check_branch
      %709 = sbr.rel (%p707) target = $region48
    $region47: #{attention_consistency.1} parent=5 // pred_region
      %s710 = ssub.s32 %s11, 2
      // Predicated region
      $region49: #{attention_consistency.1} parent=47 // pred_check
        %p711 = pneg %p170
      $region50: #{attention_consistency.1} parent=47 // pred_check_branch
        %713 = sbr.rel (%p711) target = $region52
      $region51: #{attention_consistency.1} parent=47 // pred_region
        %p714 = scmp.lt.s32.totalorder %s17, 1
        %s715 = scalar_select %p714, %s17, 1
        %s716 = smul.addr %s715, 8
        %s717 = scalar_lea.vmem %s5, %s716
      $region52: #{attention_consistency.1} parent=47 // pred_fallthru
        _
    $region48: #{attention_consistency.1} parent=5 // pred_fallthru
      _
  $region6: #{attention_consistency.1} parent=0 // loop_footer
    %s15 = sadd.s32 1, %s11
  $region7: #{attention_consistency.1} parent=0 // loop_footer_branch
    %10 = sbr.rel target = $region3
  $region8: #{attention_consistency.1} parent=0 // loop_exit
    _

</llo_original>
